<compile_context>
chip_gen: v7x
topology: tpu7x:2x2x1
jax: 0.10.0
libtpu: 0.0.40
codegen_flags: <defaults>
</compile_context>

<pallas_src>
import functools

import jax
import jax.numpy as jnp
from jax.experimental import pallas as pl
from jax.experimental.pallas import tpu as pltpu


def _pick_block_b(batch: int, max_block: int = 8) -> int:
    """Largest divisor of `batch` (<= max_block) that leaves >= 2 grid steps."""
    if batch <= 1:
        return 1
    best = 1
    for d in range(1, min(max_block, batch) + 1):
        if batch % d == 0 and batch // d >= 2:
            best = d
    return best


def _clip_embedding_kernel(tok_ref, emb_hbm, pos_ref, out_ref, row_buf, sem,
                           *, block_b, seq_len):
    # tok_ref : SMEM (B, T) int32      scalar-prefetched, pre-clamped token ids
    # emb_hbm : HBM  (n_vocab, D)      raw ref, gathered row-by-row via DMA
    # pos_ref : VMEM (T, D)            resident positional table
    # out_ref : VMEM (block_b, T, D)   this step's output block
    # row_buf : VMEM (block_b, T, D)   gathered embedding rows
    # sem     : single DMA semaphore shared by every row copy of this step
    b0 = pl.program_id(0) * block_b   # first batch row handled by this step

    # Issue every row-gather DMA for the whole (block_b, T) block back-to-back
    # so they are all in flight together (block_b and seq_len are compile-time
    # constants -> fully unrolled issue loop, no per-row clamps or waits).
    for bb in range(block_b):
        for t in range(seq_len):
            tid = tok_ref[b0 + bb, t]
            pltpu.make_async_copy(
                emb_hbm.at[pl.ds(tid, 1), :],
                row_buf.at[bb, pl.ds(t, 1), :],
                sem,
            ).start()

    # Aggregate waits: DMA semaphores are byte-counted, so one (T, D)-sized
    # wait per batch row retires all `seq_len` single-row copies for that row
    # (block_b waits total instead of block_b * seq_len sequential waits).
    for bb in range(block_b):
        pltpu.make_async_copy(
            emb_hbm.at[pl.ds(0, seq_len), :],   # size/space template only
            row_buf.at[bb],
            sem,
        ).wait()

    # One bulk, lane-dense add + store for the whole (block_b, T, D) slab.
    # Compute in f32 (safe on v5e: no bf16 VPU) and cast explicitly on store.
    rows = row_buf[...].astype(jnp.float32)
    pos = pos_ref[...].astype(jnp.float32)       # (T, D) broadcasts over block_b
    out_ref[...] = (rows + pos).astype(out_ref.dtype)


def clip_embedding(tokens, token_embedding, position_embedding):
    """tokens: (B, T) int; token_embedding: (n_vocab, D); position_embedding: (T, D)."""
    B, T = tokens.shape
    n_vocab, D = token_embedding.shape
    assert position_embedding.shape == (T, D)
    # The aggregate-wait size template slices the first T vocab rows.
    assert n_vocab >= T, "vocab table must have at least seq_len rows"

    block_b = _pick_block_b(B)
    grid_b = B // block_b
    out_dtype = token_embedding.dtype
    itemsize = jnp.dtype(out_dtype).itemsize

    # Clamp once here (hoisted out of the per-row DMA issue chain) and narrow
    # to int32 (CLIP's 49408-entry vocab fits easily).
    tokens = jnp.clip(tokens.astype(jnp.int32), 0, n_vocab - 1)

    kernel = functools.partial(_clip_embedding_kernel, block_b=block_b, seq_len=T)

    # Memory-bound hint for XLA's scheduler: gather B*T table rows + positional
    # table reads, write B*T*D, plus the token ids.
    cost = pl.CostEstimate(
        flops=B * T * D,
        transcendentals=0,
        bytes_accessed=2 * B * T * D * itemsize + T * D * itemsize + B * T * 4,
    )

    return pl.pallas_call(
        kernel,
        out_shape=jax.ShapeDtypeStruct((B, T, D), out_dtype),
        grid_spec=pltpu.PrefetchScalarGridSpec(
            num_scalar_prefetch=1,                          # tokens -> SMEM
            grid=(grid_b,),
            in_specs=[
                pl.BlockSpec(memory_space=pl.ANY),          # vocab table stays in HBM
                pl.BlockSpec((T, D), lambda i, tok: (0, 0)),  # positional table (VMEM)
            ],
            out_specs=pl.BlockSpec((block_b, T, D), lambda i, tok: (i, 0, 0)),
            scratch_shapes=[
                pltpu.VMEM((block_b, T, D), token_embedding.dtype),  # gathered rows
                pltpu.SemaphoreType.DMA,                             # ONE shared DMA sem
            ],
        ),
        compiler_params=pltpu.CompilerParams(
            dimension_semantics=("parallel",)),             # batch blocks independent
        cost_estimate=cost,
    )(tokens, token_embedding, position_embedding)


if __name__ == "__main__":
    # Small shapes consistent with the module's forward (lane-dense D).
    n_vocab, n_embed, n_tokens = 512, 128, 8
    batch = 2

    key = jax.random.PRNGKey(0)
    k_tok, k_emb, k_pos = jax.random.split(key, 3)

    tokens = jax.random.randint(k_tok, (batch, n_tokens), 0, n_vocab, dtype=jnp.int32)
    token_embedding = jax.random.normal(k_emb, (n_vocab, n_embed), dtype=jnp.float32) * 0.02
    # nn.Parameter(torch.zeros(...)) is zeros at init; random here so the add is exercised.
    position_embedding = jax.random.normal(k_pos, (n_tokens, n_embed), dtype=jnp.float32) * 0.01

    out = clip_embedding(tokens, token_embedding, position_embedding)
    out = jax.block_until_ready(out)

    # Pure-JAX reference for correctness.
    ref = token_embedding[tokens] + position_embedding[None, :, :]
    assert out.shape == (batch, n_tokens, n_embed)
    assert jnp.allclose(out, ref, atol=1e-6), "mismatch vs reference"

    print("KERNEL_OK")
</pallas_src>

<mosaic_0001>
module attributes {stable_mosaic.version = 11 : i64} {
  func.func @_clip_embedding_kernel(%arg0: i32, %arg1: memref<2x8xi32, #tpu.memory_space<smem>>, %arg2: memref<512x128xf32, #tpu.memory_space<any>>, %arg3: memref<8x128xf32, #tpu.memory_space<vmem>>, %arg4: memref<1x8x128xf32, #tpu.memory_space<vmem>>, %arg5: memref<1x8x128xf32, #tpu.memory_space<vmem>>, %arg6: memref<!tpu.dma_semaphore, #tpu.memory_space<semaphore_mem>>) attributes {dimension_semantics = [#tpu.dimension_semantics<parallel>], iteration_bounds = array<i64: 2>, scalar_prefetch = 1 : i64, scratch_operands = 2 : i64, tpu.core_type = #tpu.core_type<tc>, window_params = [{}, {pipeline_mode = #tpu.pipeline_mode<synchronous>, transform_indices = @transform_1, window_bounds = array<i64: 8, 128>}, {transform_indices = @transform_2, window_bounds = array<i64: 1, 8, 128>}]} {
    %c1_i32 = arith.constant 1 : i32
    %0 = arith.muli %arg0, %c1_i32 : i32
    %c0_i32 = arith.constant 0 : i32
    %1 = arith.addi %0, %c0_i32 : i32
    %2 = arith.index_cast %1 : i32 to index
    %c0 = arith.constant 0 : index
    %3 = memref.load %arg1[%2, %c0] : memref<2x8xi32, #tpu.memory_space<smem>>
    %c0_i32_0 = arith.constant 0 : i32
    %c0_i32_1 = arith.constant 0 : i32
    %4 = tpu.memref_slice %arg2[%3, %c0_i32_1] : memref<512x128xf32, #tpu.memory_space<any>> -> memref<1x128xf32, #tpu.memory_space<any>>
    %c0_i32_2 = arith.constant 0 : i32
    %c0_i32_3 = arith.constant 0 : i32
    %5 = tpu.memref_slice %arg5[%c0_i32_0, %c0_i32_2, %c0_i32_3] : memref<1x8x128xf32, #tpu.memory_space<vmem>> -> memref<1x1x128xf32, #tpu.memory_space<vmem>>
    %6 = tpu.memref_squeeze %5 : memref<1x1x128xf32, #tpu.memory_space<vmem>> -> memref<1x128xf32, #tpu.memory_space<vmem>>
    tpu.enqueue_dma source(%4 : memref<1x128xf32, #tpu.memory_space<any>>) target(%6 : memref<1x128xf32, #tpu.memory_space<vmem>>) target_semaphore(%arg6 : memref<!tpu.dma_semaphore, #tpu.memory_space<semaphore_mem>>)
    %c0_i32_4 = arith.constant 0 : i32
    %7 = arith.addi %0, %c0_i32_4 : i32
    %8 = arith.index_cast %7 : i32 to index
    %c1 = arith.constant 1 : index
    %9 = memref.load %arg1[%8, %c1] : memref<2x8xi32, #tpu.memory_space<smem>>
    %c0_i32_5 = arith.constant 0 : i32
    %c0_i32_6 = arith.constant 0 : i32
    %10 = tpu.memref_slice %arg2[%9, %c0_i32_6] : memref<512x128xf32, #tpu.memory_space<any>> -> memref<1x128xf32, #tpu.memory_space<any>>
    %c1_i32_7 = arith.constant 1 : i32
    %c0_i32_8 = arith.constant 0 : i32
    %11 = tpu.memref_slice %arg5[%c0_i32_5, %c1_i32_7, %c0_i32_8] : memref<1x8x128xf32, #tpu.memory_space<vmem>> -> memref<1x1x128xf32, #tpu.memory_space<vmem>>
    %12 = tpu.memref_squeeze %11 : memref<1x1x128xf32, #tpu.memory_space<vmem>> -> memref<1x128xf32, #tpu.memory_space<vmem>>
    tpu.enqueue_dma source(%10 : memref<1x128xf32, #tpu.memory_space<any>>) target(%12 : memref<1x128xf32, #tpu.memory_space<vmem>>) target_semaphore(%arg6 : memref<!tpu.dma_semaphore, #tpu.memory_space<semaphore_mem>>)
    %c0_i32_9 = arith.constant 0 : i32
    %13 = arith.addi %0, %c0_i32_9 : i32
    %14 = arith.index_cast %13 : i32 to index
    %c2 = arith.constant 2 : index
    %15 = memref.load %arg1[%14, %c2] : memref<2x8xi32, #tpu.memory_space<smem>>
    %c0_i32_10 = arith.constant 0 : i32
    %c0_i32_11 = arith.constant 0 : i32
    %16 = tpu.memref_slice %arg2[%15, %c0_i32_11] : memref<512x128xf32, #tpu.memory_space<any>> -> memref<1x128xf32, #tpu.memory_space<any>>
    %c2_i32 = arith.constant 2 : i32
    %c0_i32_12 = arith.constant 0 : i32
    %17 = tpu.memref_slice %arg5[%c0_i32_10, %c2_i32, %c0_i32_12] : memref<1x8x128xf32, #tpu.memory_space<vmem>> -> memref<1x1x128xf32, #tpu.memory_space<vmem>>
    %18 = tpu.memref_squeeze %17 : memref<1x1x128xf32, #tpu.memory_space<vmem>> -> memref<1x128xf32, #tpu.memory_space<vmem>>
    tpu.enqueue_dma source(%16 : memref<1x128xf32, #tpu.memory_space<any>>) target(%18 : memref<1x128xf32, #tpu.memory_space<vmem>>) target_semaphore(%arg6 : memref<!tpu.dma_semaphore, #tpu.memory_space<semaphore_mem>>)
    %c0_i32_13 = arith.constant 0 : i32
    %19 = arith.addi %0, %c0_i32_13 : i32
    %20 = arith.index_cast %19 : i32 to index
    %c3 = arith.constant 3 : index
    %21 = memref.load %arg1[%20, %c3] : memref<2x8xi32, #tpu.memory_space<smem>>
    %c0_i32_14 = arith.constant 0 : i32
    %c0_i32_15 = arith.constant 0 : i32
    %22 = tpu.memref_slice %arg2[%21, %c0_i32_15] : memref<512x128xf32, #tpu.memory_space<any>> -> memref<1x128xf32, #tpu.memory_space<any>>
    %c3_i32 = arith.constant 3 : i32
    %c0_i32_16 = arith.constant 0 : i32
    %23 = tpu.memref_slice %arg5[%c0_i32_14, %c3_i32, %c0_i32_16] : memref<1x8x128xf32, #tpu.memory_space<vmem>> -> memref<1x1x128xf32, #tpu.memory_space<vmem>>
    %24 = tpu.memref_squeeze %23 : memref<1x1x128xf32, #tpu.memory_space<vmem>> -> memref<1x128xf32, #tpu.memory_space<vmem>>
    tpu.enqueue_dma source(%22 : memref<1x128xf32, #tpu.memory_space<any>>) target(%24 : memref<1x128xf32, #tpu.memory_space<vmem>>) target_semaphore(%arg6 : memref<!tpu.dma_semaphore, #tpu.memory_space<semaphore_mem>>)
    %c0_i32_17 = arith.constant 0 : i32
    %25 = arith.addi %0, %c0_i32_17 : i32
    %26 = arith.index_cast %25 : i32 to index
    %c4 = arith.constant 4 : index
    %27 = memref.load %arg1[%26, %c4] : memref<2x8xi32, #tpu.memory_space<smem>>
    %c0_i32_18 = arith.constant 0 : i32
    %c0_i32_19 = arith.constant 0 : i32
    %28 = tpu.memref_slice %arg2[%27, %c0_i32_19] : memref<512x128xf32, #tpu.memory_space<any>> -> memref<1x128xf32, #tpu.memory_space<any>>
    %c4_i32 = arith.constant 4 : i32
    %c0_i32_20 = arith.constant 0 : i32
    %29 = tpu.memref_slice %arg5[%c0_i32_18, %c4_i32, %c0_i32_20] : memref<1x8x128xf32, #tpu.memory_space<vmem>> -> memref<1x1x128xf32, #tpu.memory_space<vmem>>
    %30 = tpu.memref_squeeze %29 : memref<1x1x128xf32, #tpu.memory_space<vmem>> -> memref<1x128xf32, #tpu.memory_space<vmem>>
    tpu.enqueue_dma source(%28 : memref<1x128xf32, #tpu.memory_space<any>>) target(%30 : memref<1x128xf32, #tpu.memory_space<vmem>>) target_semaphore(%arg6 : memref<!tpu.dma_semaphore, #tpu.memory_space<semaphore_mem>>)
    %c0_i32_21 = arith.constant 0 : i32
    %31 = arith.addi %0, %c0_i32_21 : i32
    %32 = arith.index_cast %31 : i32 to index
    %c5 = arith.constant 5 : index
    %33 = memref.load %arg1[%32, %c5] : memref<2x8xi32, #tpu.memory_space<smem>>
    %c0_i32_22 = arith.constant 0 : i32
    %c0_i32_23 = arith.constant 0 : i32
    %34 = tpu.memref_slice %arg2[%33, %c0_i32_23] : memref<512x128xf32, #tpu.memory_space<any>> -> memref<1x128xf32, #tpu.memory_space<any>>
    %c5_i32 = arith.constant 5 : i32
    %c0_i32_24 = arith.constant 0 : i32
    %35 = tpu.memref_slice %arg5[%c0_i32_22, %c5_i32, %c0_i32_24] : memref<1x8x128xf32, #tpu.memory_space<vmem>> -> memref<1x1x128xf32, #tpu.memory_space<vmem>>
    %36 = tpu.memref_squeeze %35 : memref<1x1x128xf32, #tpu.memory_space<vmem>> -> memref<1x128xf32, #tpu.memory_space<vmem>>
    tpu.enqueue_dma source(%34 : memref<1x128xf32, #tpu.memory_space<any>>) target(%36 : memref<1x128xf32, #tpu.memory_space<vmem>>) target_semaphore(%arg6 : memref<!tpu.dma_semaphore, #tpu.memory_space<semaphore_mem>>)
    %c0_i32_25 = arith.constant 0 : i32
    %37 = arith.addi %0, %c0_i32_25 : i32
    %38 = arith.index_cast %37 : i32 to index
    %c6 = arith.constant 6 : index
    %39 = memref.load %arg1[%38, %c6] : memref<2x8xi32, #tpu.memory_space<smem>>
    %c0_i32_26 = arith.constant 0 : i32
    %c0_i32_27 = arith.constant 0 : i32
    %40 = tpu.memref_slice %arg2[%39, %c0_i32_27] : memref<512x128xf32, #tpu.memory_space<any>> -> memref<1x128xf32, #tpu.memory_space<any>>
    %c6_i32 = arith.constant 6 : i32
    %c0_i32_28 = arith.constant 0 : i32
    %41 = tpu.memref_slice %arg5[%c0_i32_26, %c6_i32, %c0_i32_28] : memref<1x8x128xf32, #tpu.memory_space<vmem>> -> memref<1x1x128xf32, #tpu.memory_space<vmem>>
    %42 = tpu.memref_squeeze %41 : memref<1x1x128xf32, #tpu.memory_space<vmem>> -> memref<1x128xf32, #tpu.memory_space<vmem>>
    tpu.enqueue_dma source(%40 : memref<1x128xf32, #tpu.memory_space<any>>) target(%42 : memref<1x128xf32, #tpu.memory_space<vmem>>) target_semaphore(%arg6 : memref<!tpu.dma_semaphore, #tpu.memory_space<semaphore_mem>>)
    %c0_i32_29 = arith.constant 0 : i32
    %43 = arith.addi %0, %c0_i32_29 : i32
    %44 = arith.index_cast %43 : i32 to index
    %c7 = arith.constant 7 : index
    %45 = memref.load %arg1[%44, %c7] : memref<2x8xi32, #tpu.memory_space<smem>>
    %c0_i32_30 = arith.constant 0 : i32
    %c0_i32_31 = arith.constant 0 : i32
    %46 = tpu.memref_slice %arg2[%45, %c0_i32_31] : memref<512x128xf32, #tpu.memory_space<any>> -> memref<1x128xf32, #tpu.memory_space<any>>
    %c7_i32 = arith.constant 7 : i32
    %c0_i32_32 = arith.constant 0 : i32
    %47 = tpu.memref_slice %arg5[%c0_i32_30, %c7_i32, %c0_i32_32] : memref<1x8x128xf32, #tpu.memory_space<vmem>> -> memref<1x1x128xf32, #tpu.memory_space<vmem>>
    %48 = tpu.memref_squeeze %47 : memref<1x1x128xf32, #tpu.memory_space<vmem>> -> memref<1x128xf32, #tpu.memory_space<vmem>>
    tpu.enqueue_dma source(%46 : memref<1x128xf32, #tpu.memory_space<any>>) target(%48 : memref<1x128xf32, #tpu.memory_space<vmem>>) target_semaphore(%arg6 : memref<!tpu.dma_semaphore, #tpu.memory_space<semaphore_mem>>)
    %c0_i32_33 = arith.constant 0 : i32
    %c0_i32_34 = arith.constant 0 : i32
    %c0_i32_35 = arith.constant 0 : i32
    %49 = tpu.memref_slice %arg2[%c0_i32_34, %c0_i32_35] : memref<512x128xf32, #tpu.memory_space<any>> -> memref<8x128xf32, #tpu.memory_space<any>>
    %c0_i32_36 = arith.constant 0 : i32
    %c0_i32_37 = arith.constant 0 : i32
    %50 = tpu.memref_slice %arg5[%c0_i32_33, %c0_i32_36, %c0_i32_37] : memref<1x8x128xf32, #tpu.memory_space<vmem>> -> memref<1x8x128xf32, #tpu.memory_space<vmem>>
    %51 = tpu.memref_squeeze %50 : memref<1x8x128xf32, #tpu.memory_space<vmem>> -> memref<8x128xf32, #tpu.memory_space<vmem>>
    tpu.wait_dma2 semaphore(%arg6 : memref<!tpu.dma_semaphore, #tpu.memory_space<semaphore_mem>>) src(%49 : memref<8x128xf32, #tpu.memory_space<any>>) dst(%51 : memref<8x128xf32, #tpu.memory_space<vmem>>)
    %c0_38 = arith.constant 0 : index
    %c0_39 = arith.constant 0 : index
    %c0_40 = arith.constant 0 : index
    %52 = vector.load %arg5[%c0_38, %c0_39, %c0_40] : memref<1x8x128xf32, #tpu.memory_space<vmem>>, vector<1x8x128xf32>
    %c0_41 = arith.constant 0 : index
    %c0_42 = arith.constant 0 : index
    %53 = vector.load %arg3[%c0_41, %c0_42] : memref<8x128xf32, #tpu.memory_space<vmem>>, vector<8x128xf32>
    %54 = vector.shape_cast %53 : vector<8x128xf32> to vector<1x8x128xf32>
    %55 = arith.addf %52, %54 : vector<1x8x128xf32>
    %c0_43 = arith.constant 0 : index
    %c0_44 = arith.constant 0 : index
    %c0_45 = arith.constant 0 : index
    %56 = vector.load %arg4[%c0_43, %c0_44, %c0_45] : memref<1x8x128xf32, #tpu.memory_space<vmem>>, vector<1x8x128xf32>
    tpu.vector_store %arg4[%c0_43, %c0_44, %c0_45], %55 {strides = array<i32>} : memref<1x8x128xf32, #tpu.memory_space<vmem>>, vector<1x8x128xf32>,
    return
  }
  func.func @transform_1(%arg0: i32, %arg1: memref<2x8xi32, #tpu.memory_space<smem>>) -> (i32, i32) {
    %c0_i32 = arith.constant 0 : i32
    %c0_i32_0 = arith.constant 0 : i32
    %c0_i32_1 = arith.constant 0 : i32
    return %c0_i32, %c0_i32_0 : i32, i32
  }
  func.func @transform_2(%arg0: i32, %arg1: memref<2x8xi32, #tpu.memory_space<smem>>) -> (i32, i32, i32) {
    %c0_i32 = arith.constant 0 : i32
    %c0_i32_0 = arith.constant 0 : i32
    %c0_i32_1 = arith.constant 0 : i32
    return %arg0, %c0_i32, %c0_i32_0 : i32, i32, i32
  }
}

</mosaic_0001>

<llo_original>
// kernel: tpu_custom_call.1
$region0: #{tpu_custom_call.1}
  #allocation0 [shape = 'u32[]', space=smem, size = 0x4, offset = 0x4, fixed_abs, tag = 'smem constant byte address 0x4 - core index']
  #allocation1 [shape = 'u32[144,128]{1,0:T(1,128)}', space=vmem, size = 0x12000, scoped, tag = 'internal scratch']
  #allocation2 [shape = 'f32[1,8,128]{2,1,0:T(8,128)}', space=vmem, size = 0x1000, scoped, tag = 'scratch operand']
  #allocation3 [shape = 's32[1]{0}', space=sflag, size = 0x4, scoped, tag = 'scratch operand']
  #allocation4 [shape = 's32[1]{0}', space=sflag, size = 0x4, scoped, tag = 'scoped memory for tpu_custom_call.1']
  #allocation5 [shape = 'u8[1024]{0}', space=smem, size = 0x400, scoped, tag = 'prefetched SMEM operand 0']
  #allocation10 [shape = 's32[]', space=sflag, size = 0x4, offset = 0, fixed_abs, tag = 'sflag constant byte address 0x0 - dummy sync flag']
  #allocation11 [shape = 's32[]', space=sflag, size = 0x4, offset = 0, fixed_abs, tag = 'sflag constant byte address 0x0 - dummy sync flag']
  #allocation12 [shape = 'u32[]', space=smem, size = 0x4, offset = 0x44, fixed_abs, tag = 'smem constant byte address 0x44 - assertion arg 0']
  #allocation13 [shape = 'u32[]', space=smem, size = 0x4, offset = 0x48, fixed_abs, tag = 'smem constant byte address 0x48 - assertion arg 1']
  #allocation14 [shape = 's32[]', space=sflag, size = 0x4, offset = 0, fixed_abs, tag = 'sflag constant byte address 0x0 - dummy sync flag']
  #allocation15 [shape = 's32[]', space=sflag, size = 0x4, offset = 0, fixed_abs, tag = 'sflag constant byte address 0x0 - dummy sync flag']
  #allocation16 [shape = 's32[]', space=sflag, size = 0x4, offset = 0, fixed_abs, tag = 'sflag constant byte address 0x0 - dummy sync flag']
  #allocation17 [shape = 's32[]', space=sflag, size = 0x4, offset = 0, fixed_abs, tag = 'sflag constant byte address 0x0 - dummy sync flag']
  #allocation18 [shape = 's32[]', space=sflag, size = 0x4, offset = 0, fixed_abs, tag = 'sflag constant byte address 0x0 - dummy sync flag']
  #allocation19 [shape = 's32[]', space=sflag, size = 0x4, offset = 0, fixed_abs, tag = 'sflag constant byte address 0x0 - dummy sync flag']
  #allocation20 [shape = 's32[]', space=sflag, size = 0x4, offset = 0, fixed_abs, tag = 'sflag constant byte address 0x0 - dummy sync flag']
  #allocation21 [shape = 's32[]', space=sflag, size = 0x4, offset = 0, fixed_abs, tag = 'sflag constant byte address 0x0 - dummy sync flag']
  #allocation22 [shape = 's32[]', space=sflag, size = 0x4, offset = 0, fixed_abs, tag = 'sflag constant byte address 0x0 - dummy sync flag']
  #allocation23 [shape = 's32[]', space=sflag, size = 0x4, offset = 0, fixed_abs, tag = 'sflag constant byte address 0x0 - dummy sync flag']
  #allocation24 [shape = 's32[]', space=sflag, size = 0x4, offset = 0, fixed_abs, tag = 'sflag constant byte address 0x0 - dummy sync flag']
  #allocation25 [shape = 's32[]', space=sflag, size = 0x4, offset = 0, fixed_abs, tag = 'sflag constant byte address 0x0 - dummy sync flag']
  #allocation26 [shape = 's32[]', space=sflag, size = 0x4, offset = 0, fixed_abs, tag = 'sflag constant byte address 0x0 - dummy sync flag']
  #allocation27 [shape = 's32[]', space=sflag, size = 0x4, offset = 0, fixed_abs, tag = 'sflag constant byte address 0x0 - dummy sync flag']
  %s0 = inlined_call_operand.hbm [shape: s32[2,8], index: 0, kind: input, shape index: {}]
  %s1 = inlined_call_operand.hbm [shape: f32[512,128], index: 1, kind: input, shape index: {}]
  %s2 = inlined_call_operand.hbm [shape: f32[8,128], index: 2, kind: input, shape index: {}]
  %s3 = inlined_call_operand.hbm [shape: f32[2,8,128], index: 3, kind: output, shape index: {}]
  %s4 = sld [smem:[#allocation0]]
  $region73: #{tpu_custom_call.1} parent=0
    _
  %s6 = ssub.s32 1, %s4
  %s7 = scalar_select 0, %s6, %s4
  %9 = dma.hbm_to_smem %s0, 32, [#allocation5], [#allocation4]
  %10 = dma.done [#allocation4], 32
  %11 = sfence
  $region1: #{tpu_custom_call.1} parent=0
    #allocation6 [shape = 'u8[4096]{0}', space=vmem, size = 0x1000, scoped, tag = 'input window, operand 2, single buffered']
    #allocation7 [shape = 's32[2]{0}', space=sflag, size = 0x8, scoped, tag = 'scoped memory for tpu_custom_call.1']
    #allocation8 [shape = 's32[2]{0}', space=sflag, size = 0x8, scoped, tag = 'scoped memory for tpu_custom_call.1']
    #allocation9 [shape = 'u8[8192]{0}', space=vmem, size = 0x2000, scoped, tag = 'output window, operand 0']
    %12 = vsyncpa [#allocation7], 0
    %13 = vsyncpa [#allocation8], 0
    %s14 = scalar_lea.sflag [#allocation8], 1
    %15 = vsyncpa %s14, 0
    loop: start=0, step=1, limit=4
    $region2: #{tpu_custom_call.1} parent=1 // loop_pre_header
      _
    $region3: #{tpu_custom_call.1} parent=1 // loop_header
      %s17 = sphi 0, %s21
      %p18 = scmp.ge.s32.totalorder %s17, 4
      %s25 = sphi 0, %s25
      %s27 = sphi 0, %s25
      %s28 = sphi 0, %s27
      %s42 = sphi 0, %s28
      %s48 = sphi 0, %s50
      %s51 = sphi 0, %s48
      %s52 = sphi 0, %s51
      %s68 = sphi 0, %s52
    $region4: #{tpu_custom_call.1} parent=1 // loop_header_branch
      %20 = sbr.rel (%p18) target = $region8
    $region5: #{tpu_custom_call.1} parent=1 // loop_body
      %s22 = ssub.s32 %s17, 1
      %s23 = ssub.s32 %s17, 2
      %s24 = sadd.s32 %s17, 1
      %s26 = sadd.s32 %s25, 1
      %p29 = scmp.eq.s32.totalorder %s17, 1
      %p30 = scmp.ne.s32.totalorder %s25, %s27
      %p31 = scmp.eq.s32.totalorder %s17, 0
      %p32 = por %p30, %p31
      %p33 = scmp.ne.s32.totalorder %s25, %s27
      %p34 = scmp.eq.s32.totalorder %s22, 1
      %p35 = por %p33, %p34
      %p36 = scmp.ne.s32.totalorder %s27, %s28
      %p37 = scmp.eq.s32.totalorder %s22, 0
      %p38 = por %p36, %p37
      %p39 = scmp.ne.s32.totalorder %s27, %s28
      %p40 = scmp.eq.s32.totalorder %s23, 1
      %p41 = por %p39, %p40
      %p43 = scmp.ne.s32.totalorder %s28, %s42
      %p44 = scmp.eq.s32.totalorder %s23, 0
      %p45 = por %p43, %p44
      %s46 = ssub.s32 %s17, %s24
      %p47 = scmp.eq.s32.totalorder %s46, 0
      %s49 = sadd.s32 %s48, 1
      %s50 = scalar_select %p47, %s48, %s49
      %p53 = pneg %p47
      %p54 = scmp.eq.s32.totalorder %s17, 1
      %p55 = por %p53, %p54
      %p56 = scmp.ne.s32.totalorder %s48, %s51
      %p57 = scmp.eq.s32.totalorder %s17, 0
      %p58 = por %p56, %p57
      %p59 = scmp.ne.s32.totalorder %s48, %s51
      %p60 = scmp.eq.s32.totalorder %s22, 1
      %p61 = por %p59, %p60
      %p62 = scmp.ne.s32.totalorder %s51, %s52
      %p63 = scmp.eq.s32.totalorder %s22, 0
      %p64 = por %p62, %p63
      %p65 = scmp.ne.s32.totalorder %s51, %s52
      %p66 = scmp.eq.s32.totalorder %s23, 1
      %p67 = por %p65, %p66
      %p69 = scmp.ne.s32.totalorder %s52, %s68
      %p70 = scmp.eq.s32.totalorder %s23, 0
      %p71 = por %p69, %p70
      %p72 = scmp.le.s32.totalorder 1, %s17
      %p73 = scmp.lt.s32.totalorder %s17, 3
      %p74 = pnand %p72, %p73
      %p75 = pneg %p74
      // Predicated region
      $region9: #{tpu_custom_call.1} parent=5 // pred_check
        _
      $region10: #{tpu_custom_call.1} parent=5 // pred_check_branch
        %77 = sbr.rel (%p74) target = $region12
      $region11: #{tpu_custom_call.1} parent=5 // pred_region
        %s78 = ssub.s32 %s17, 1
        // Predicated region
        $region13: #{tpu_custom_call.1} parent=11 // pred_check
          %p79 = pneg %p38
        $region14: #{tpu_custom_call.1} parent=11 // pred_check_branch
          %81 = sbr.rel (%p79) target = $region16
        $region15: #{tpu_custom_call.1} parent=11 // pred_region
          %s83 = ssub.s32 128, 128
          %84 = vsyncadd [#allocation7], %s83
          %s86 = sshll.u32 [#allocation6], 4
          %s87 = int_to_ptr.vmem [resolvable:$true] %s86
          %89 = dma.hbm_to_vmem [thread:$0]  %s2, 128, %s87, [#allocation7]
        $region16: #{tpu_custom_call.1} parent=11 // pred_fallthru
          _
      $region12: #{tpu_custom_call.1} parent=5 // pred_fallthru
        _
      %p90 = scmp.lt.s32.totalorder %s17, 2
      // Predicated region
      $region17: #{tpu_custom_call.1} parent=5 // pred_check
        %p91 = pneg %p90
      $region18: #{tpu_custom_call.1} parent=5 // pred_check_branch
        %93 = sbr.rel (%p91) target = $region20
      $region19: #{tpu_custom_call.1} parent=5 // pred_region
        _
      $region20: #{tpu_custom_call.1} parent=5 // pred_fallthru
        _
      %p94 = scmp.le.s32.totalorder 1, %s17
      %p95 = scmp.lt.s32.totalorder %s17, 3
      %p96 = pnand %p94, %p95
      %p97 = pneg %p96
      // Predicated region
      $region21: #{tpu_custom_call.1} parent=5 // pred_check
        _
      $region22: #{tpu_custom_call.1} parent=5 // pred_check_branch
        %99 = sbr.rel (%p96) target = $region24
      $region23: #{tpu_custom_call.1} parent=5 // pred_region
        %s100 = ssub.s32 %s17, 1
        // Predicated region
        $region25: #{tpu_custom_call.1} parent=23 // pred_check
          %p101 = pneg %p38
        $region26: #{tpu_custom_call.1} parent=23 // pred_check_branch
          %103 = sbr.rel (%p101) target = $region28
        $region27: #{tpu_custom_call.1} parent=23 // pred_region
          %104 = dma.done [#allocation7], 128
        $region28: #{tpu_custom_call.1} parent=23 // pred_fallthru
          _
        %p105 = pneg %p38
        %p106 = pneg %p35
        %p107 = pneg %p64
        %p108 = pneg %p61
        %s109 = sand.u32 %s51, 1
        %s110 = scalar_lea.sflag [#allocation8], %s109
        %s111 = sand.u32 %s51, 1
        %s112 = smul.addr %s111, 8
        %s113 = scalar_lea.vmem [#allocation9], %s112
        %s114 = smul.u32 %s22, 128
        %s115 = sld [smem:[#allocation5 + %s114]]
        %s116 = smul.addr %s115, 16
        %s117 = scalar_lea.hbm %s1, %s116
        // Predicated region
        $region29: #{tpu_custom_call.1} parent=23 // pred_check
          _
        $region30: #{tpu_custom_call.1} parent=23 // pred_check_branch
          %119 = sbr.rel target = $region32
        $region31: #{tpu_custom_call.1} parent=23 // pred_region
          %120 = sst [smem:[#allocation12]] [#allocation11]
          %121 = sst [smem:[#allocation13]] [#allocation10]
        $region32: #{tpu_custom_call.1} parent=23 // pred_fallthru
          _
        %123 = shalt.err (0)
        %s125 = sshll.u32 [#allocation2], 4
        %s126 = int_to_ptr.vmem [resolvable:$true] %s125
        %128 = dma.hbm_to_vmem [thread:$0]  %s117, 16, %s126, [#allocation3]
        %s129 = sadd.s32 %s114, 1
        %s130 = sld [smem:[#allocation5 + %s129]]
        %s131 = smul.addr %s130, 16
        %s132 = scalar_lea.hbm %s1, %s131
        %s133 = scalar_lea.vmem [#allocation2], 1
        // Predicated region
        $region33: #{tpu_custom_call.1} parent=23 // pred_check
          _
        $region34: #{tpu_custom_call.1} parent=23 // pred_check_branch
          %135 = sbr.rel target = $region36
        $region35: #{tpu_custom_call.1} parent=23 // pred_region
          %136 = sst [smem:[#allocation12]] [#allocation15]
          %137 = sst [smem:[#allocation13]] [#allocation14]
        $region36: #{tpu_custom_call.1} parent=23 // pred_fallthru
          _
        %139 = shalt.err (0)
        %s141 = sshll.u32 %s133, 4
        %s142 = int_to_ptr.vmem [resolvable:$true] %s141
        %144 = dma.hbm_to_vmem [thread:$0]  %s132, 16, %s142, [#allocation3]
        %s145 = sadd.s32 %s114, 2
        %s146 = sld [smem:[#allocation5 + %s145]]
        %s147 = smul.addr %s146, 16
        %s148 = scalar_lea.hbm %s1, %s147
        %s149 = scalar_lea.vmem [#allocation2], 2
        // Predicated region
        $region37: #{tpu_custom_call.1} parent=23 // pred_check
          _
        $region38: #{tpu_custom_call.1} parent=23 // pred_check_branch
          %151 = sbr.rel target = $region40
        $region39: #{tpu_custom_call.1} parent=23 // pred_region
          %152 = sst [smem:[#allocation12]] [#allocation17]
          %153 = sst [smem:[#allocation13]] [#allocation16]
        $region40: #{tpu_custom_call.1} parent=23 // pred_fallthru
          _
        %155 = shalt.err (0)
        %s157 = sshll.u32 %s149, 4
        %s158 = int_to_ptr.vmem [resolvable:$true] %s157
        %160 = dma.hbm_to_vmem [thread:$0]  %s148, 16, %s158, [#allocation3]
        %s161 = sadd.s32 %s114, 3
        %s162 = sld [smem:[#allocation5 + %s161]]
        %s163 = smul.addr %s162, 16
        %s164 = scalar_lea.hbm %s1, %s163
        %s165 = scalar_lea.vmem [#allocation2], 3
        // Predicated region
        $region41: #{tpu_custom_call.1} parent=23 // pred_check
          _
        $region42: #{tpu_custom_call.1} parent=23 // pred_check_branch
          %167 = sbr.rel target = $region44
        $region43: #{tpu_custom_call.1} parent=23 // pred_region
          %168 = sst [smem:[#allocation12]] [#allocation19]
          %169 = sst [smem:[#allocation13]] [#allocation18]
        $region44: #{tpu_custom_call.1} parent=23 // pred_fallthru
          _
        %171 = shalt.err (0)
        %s173 = sshll.u32 %s165, 4
        %s174 = int_to_ptr.vmem [resolvable:$true] %s173
        %176 = dma.hbm_to_vmem [thread:$0]  %s164, 16, %s174, [#allocation3]
        %s177 = sadd.s32 %s114, 4
        %s178 = sld [smem:[#allocation5 + %s177]]
        %s179 = smul.addr %s178, 16
        %s180 = scalar_lea.hbm %s1, %s179
        %s181 = scalar_lea.vmem [#allocation2], 4
        // Predicated region
        $region45: #{tpu_custom_call.1} parent=23 // pred_check
          _
        $region46: #{tpu_custom_call.1} parent=23 // pred_check_branch
          %183 = sbr.rel target = $region48
        $region47: #{tpu_custom_call.1} parent=23 // pred_region
          %184 = sst [smem:[#allocation12]] [#allocation21]
          %185 = sst [smem:[#allocation13]] [#allocation20]
        $region48: #{tpu_custom_call.1} parent=23 // pred_fallthru
          _
        %187 = shalt.err (0)
        %s189 = sshll.u32 %s181, 4
        %s190 = int_to_ptr.vmem [resolvable:$true] %s189
        %192 = dma.hbm_to_vmem [thread:$0]  %s180, 16, %s190, [#allocation3]
        %s193 = sadd.s32 %s114, 5
        %s194 = sld [smem:[#allocation5 + %s193]]
        %s195 = smul.addr %s194, 16
        %s196 = scalar_lea.hbm %s1, %s195
        %s197 = scalar_lea.vmem [#allocation2], 5
        // Predicated region
        $region49: #{tpu_custom_call.1} parent=23 // pred_check
          _
        $region50: #{tpu_custom_call.1} parent=23 // pred_check_branch
          %199 = sbr.rel target = $region52
        $region51: #{tpu_custom_call.1} parent=23 // pred_region
          %200 = sst [smem:[#allocation12]] [#allocation23]
          %201 = sst [smem:[#allocation13]] [#allocation22]
        $region52: #{tpu_custom_call.1} parent=23 // pred_fallthru
          _
        %203 = shalt.err (0)
        %s205 = sshll.u32 %s197, 4
        %s206 = int_to_ptr.vmem [resolvable:$true] %s205
        %208 = dma.hbm_to_vmem [thread:$0]  %s196, 16, %s206, [#allocation3]
        %s209 = sadd.s32 %s114, 6
        %s210 = sld [smem:[#allocation5 + %s209]]
        %s211 = smul.addr %s210, 16
        %s212 = scalar_lea.hbm %s1, %s211
        %s213 = scalar_lea.vmem [#allocation2], 6
        // Predicated region
        $region53: #{tpu_custom_call.1} parent=23 // pred_check
          _
        $region54: #{tpu_custom_call.1} parent=23 // pred_check_branch
          %215 = sbr.rel target = $region56
        $region55: #{tpu_custom_call.1} parent=23 // pred_region
          %216 = sst [smem:[#allocation12]] [#allocation25]
          %217 = sst [smem:[#allocation13]] [#allocation24]
        $region56: #{tpu_custom_call.1} parent=23 // pred_fallthru
          _
        %219 = shalt.err (0)
        %s221 = sshll.u32 %s213, 4
        %s222 = int_to_ptr.vmem [resolvable:$true] %s221
        %224 = dma.hbm_to_vmem [thread:$0]  %s212, 16, %s222, [#allocation3]
        %s225 = sadd.s32 %s114, 7
        %s226 = sld [smem:[#allocation5 + %s225]]
        %s227 = smul.addr %s226, 16
        %s228 = scalar_lea.hbm %s1, %s227
        %s229 = scalar_lea.vmem [#allocation2], 7
        // Predicated region
        $region57: #{tpu_custom_call.1} parent=23 // pred_check
          _
        $region58: #{tpu_custom_call.1} parent=23 // pred_check_branch
          %231 = sbr.rel target = $region60
        $region59: #{tpu_custom_call.1} parent=23 // pred_region
          %232 = sst [smem:[#allocation12]] [#allocation27]
          %233 = sst [smem:[#allocation13]] [#allocation26]
        $region60: #{tpu_custom_call.1} parent=23 // pred_fallthru
          _
        %235 = shalt.err (0)
        %s237 = sshll.u32 %s229, 4
        %s238 = int_to_ptr.vmem [resolvable:$true] %s237
        %240 = dma.hbm_to_vmem [thread:$0]  %s228, 16, %s238, [#allocation3]
        %s241 = smul.u32 8, 1
        %s242 = sshll.u32 %s241, 4
        %243 = dma.done [#allocation3], %s242
        %v244 = vld [vmem:[#allocation2] sm:$0xff]
        %v245 = vld [vmem:[#allocation6] sm:$0xff]
        %v246 = vadd.f32 %v244, %v245
        %247 = vst [vmem:[%s113] sm:$0xff] %v246
        %s248 = sand.u32 %s51, 1
        %s249 = scalar_lea.sflag [#allocation8], %s248
        %s250 = sand.u32 %s51, 1
        %s251 = smul.addr %s250, 8
        %s252 = scalar_lea.vmem [#allocation9], %s251
        // Predicated region
        $region61: #{tpu_custom_call.1} parent=23 // pred_check
          %p253 = pneg %p61
        $region62: #{tpu_custom_call.1} parent=23 // pred_check_branch
          %255 = sbr.rel (%p253) target = $region64
        $region63: #{tpu_custom_call.1} parent=23 // pred_region
          %s257 = ssub.s32 128, 128
          %258 = vsyncadd %s249, %s257
          %s259 = smul.addr %s22, 128
          %s260 = scalar_lea.hbm %s3, %s259
          %s262 = sshll.u32 %s252, 4
          %s263 = int_to_ptr.vmem [resolvable:$true] %s262
          %265 = dma.vmem_to_hbm [thread:$0]  %s263, 128, %s260, %s249
        $region64: #{tpu_custom_call.1} parent=23 // pred_fallthru
          _
      $region24: #{tpu_custom_call.1} parent=5 // pred_fallthru
        _
      %p266 = scmp.le.s32.totalorder 2, %s17
      // Predicated region
      $region65: #{tpu_custom_call.1} parent=5 // pred_check
        %p267 = pneg %p266
      $region66: #{tpu_custom_call.1} parent=5 // pred_check_branch
        %269 = sbr.rel (%p267) target = $region68
      $region67: #{tpu_custom_call.1} parent=5 // pred_region
        %s270 = ssub.s32 %s17, 2
        // Predicated region
        $region69: #{tpu_custom_call.1} parent=67 // pred_check
          %p271 = pneg %p67
        $region70: #{tpu_custom_call.1} parent=67 // pred_check_branch
          %273 = sbr.rel (%p271) target = $region72
        $region71: #{tpu_custom_call.1} parent=67 // pred_region
          %s274 = sand.u32 %s52, 1
          %s275 = scalar_lea.sflag [#allocation8], %s274
          %s276 = sand.u32 %s52, 1
          %s277 = smul.addr %s276, 8
          %s278 = scalar_lea.vmem [#allocation9], %s277
          %279 = dma.done %s275, 128
        $region72: #{tpu_custom_call.1} parent=67 // pred_fallthru
          _
      $region68: #{tpu_custom_call.1} parent=5 // pred_fallthru
        _
    $region6: #{tpu_custom_call.1} parent=1 // loop_footer
      %s21 = sadd.s32 1, %s17
    $region7: #{tpu_custom_call.1} parent=1 // loop_footer_branch
      %16 = sbr.rel target = $region3
    $region8: #{tpu_custom_call.1} parent=1 // loop_exit
      _
    %280 = vsyncpa [#allocation7], 1
    %s281 = scalar_lea.sflag [#allocation7], 1
    %282 = vsyncpa %s281, 1
    %283 = vsyncpa [#allocation8], 1
    %s284 = scalar_lea.sflag [#allocation8], 1
    %285 = vsyncpa %s284, 1
  %286 = vsyncmov [#allocation3]
  %s287 = vpop.sfrf %286
  %p288 = scmp.eq.s32.totalorder %s287, 0
  %p289 = pneg %p288
  %291 = shalt.err (%p289)

</llo_original>
